<compile_context>
chip_gen: v6e
topology: v6e:2x2x1
jax: 0.10.0
libtpu: 0.0.40
codegen_flags: <defaults>
</compile_context>

<pallas_src>
import jax
import jax.numpy as jnp
from jax.experimental import pallas as pl
from jax.experimental.pallas import tpu as pltpu


def _round_up(x, m):
    return ((x + m - 1) // m) * m


# Per-generation tiling / VMEM defaults (see header comment).
_GEN_CONFIG = {
    "v5e": dict(tile_b=256, tile_s=1024, vmem_bytes=100 * 1024 * 1024),
    "v6e": dict(tile_b=512, tile_s=1024, vmem_bytes=104 * 1024 * 1024),
    "v7x": dict(tile_b=512, tile_s=512, vmem_bytes=52 * 1024 * 1024),
    "unknown": dict(tile_b=256, tile_s=512, vmem_bytes=None),
}


def _tpu_generation():
    try:
        kind = jax.devices()[0].device_kind.lower()
    except Exception:
        return "unknown"
    if "v5 lite" in kind or "v5lite" in kind or "v5e" in kind:
        return "v5e"
    if "v6" in kind:
        return "v6e"
    if "v7" in kind or "7x" in kind:
        return "v7x"
    return "unknown"


def _gen_config():
    gen = _tpu_generation()
    return gen, _GEN_CONFIG.get(gen, _GEN_CONFIG["unknown"])


# ----------------------------------------------------------------------------
# Kernel body (shared by the with-features / without-features variants).
# ----------------------------------------------------------------------------
def _ae_body(x_ref, bias_ref, w_enc_t_ref, b_enc_ref, w_dec_t_ref,
             xhat_ref, f_ref, acc_ref, xc_ref):
    # x_ref:       (TB, Dp)   activations tile (input dtype), s-invariant
    # bias_ref:    (1,  Dp)   AE "pre-bias", f32, s-invariant
    # w_enc_t_ref: (Dp, TS)   encoder weight slab, transposed, bf16
    # b_enc_ref:   (1,  TS)   encoder bias slab, f32
    # w_dec_t_ref: (TS, Dp)   decoder weight slab, transposed, bf16
    # xhat_ref:    (TB, Dp)   output tile (resident across the s axis)
    # f_ref:       (TB, TS)   features tile, or None
    # acc_ref:     (TB, Dp)   f32 decode accumulator (VMEM scratch)
    # xc_ref:      (TB, Dp)   bf16 centered-x cache (VMEM scratch, filled at s==0)
    s = pl.program_id(1)

    @pl.when(s == 0)
    def _init():
        acc_ref[...] = jnp.zeros_like(acc_ref)
        # Hoisted centering/cast: center in f32 (VPU) once per batch tile,
        # feed the MXU in bf16 for every subsequent dict-dim step.
        xc_ref[...] = (x_ref[...].astype(jnp.float32)
                       - bias_ref[...]).astype(jnp.bfloat16)

    x_c = xc_ref[...]                                               # (TB, Dp) bf16

    # encode slab: (TB, Dp) @ (Dp, TS) + b_enc, then ReLU  (f32 accumulate)
    pre = jnp.dot(x_c, w_enc_t_ref[...], preferred_element_type=jnp.float32)
    f = jnp.maximum(pre + b_enc_ref[...], 0.0)                      # (TB, TS) f32
    f_bf = f.astype(jnp.bfloat16)

    if f_ref is not None:
        f_ref[...] = f_bf.astype(f_ref.dtype)

    # partial decode: accumulate (TB, TS) @ (TS, Dp) into the f32 scratch
    acc_ref[...] += jnp.dot(f_bf, w_dec_t_ref[...],
                            preferred_element_type=jnp.float32)

    @pl.when(s == pl.num_programs(1) - 1)
    def _finish():
        xhat_ref[...] = (acc_ref[...] + bias_ref[...]).astype(xhat_ref.dtype)


def _ae_kernel_features(x_ref, bias_ref, we_ref, be_ref, wd_ref,
                        xhat_ref, f_ref, acc_ref, xc_ref):
    _ae_body(x_ref, bias_ref, we_ref, be_ref, wd_ref,
             xhat_ref, f_ref, acc_ref, xc_ref)


def _ae_kernel_no_features(x_ref, bias_ref, we_ref, be_ref, wd_ref,
                           xhat_ref, acc_ref, xc_ref):
    _ae_body(x_ref, bias_ref, we_ref, be_ref, wd_ref,
             xhat_ref, None, acc_ref, xc_ref)


# ----------------------------------------------------------------------------
# One-time parameter preparation (transpose + bf16 cast + padding).
# ----------------------------------------------------------------------------
def prepare_autoencoder_params(bias, w_enc, b_enc, w_dec, *, tile_s=None):
    """
    bias:  (D,)    AutoEncoder.bias
    w_enc: (S, D)  encoder.weight   (PyTorch Linear layout: out x in)
    b_enc: (S,)    encoder.bias
    w_dec: (D, S)  decoder.weight   (out x in), columns normalized in __init__

    Returns padded, transposed, bf16 weights in matmul-friendly layouts.
    Zero-padding D (to 128 lanes) and S (to the dict tile) leaves the math
    unchanged: padded feature columns are relu(0)=0 and contribute 0 to decode.
    """
    D = int(bias.shape[0])
    S = int(b_enc.shape[0])
    d_pad = _round_up(D, 128)
    if tile_s is None:
        _, cfg = _gen_config()
        tile_s = min(_round_up(S, 128), cfg["tile_s"])
    s_pad = _round_up(S, tile_s)

    w_enc_t = jnp.zeros((d_pad, s_pad), jnp.bfloat16)
    w_enc_t = w_enc_t.at[:D, :S].set(jnp.transpose(w_enc).astype(jnp.bfloat16))
    w_dec_t = jnp.zeros((s_pad, d_pad), jnp.bfloat16)
    w_dec_t = w_dec_t.at[:S, :D].set(jnp.transpose(w_dec).astype(jnp.bfloat16))
    bias_row = jnp.zeros((1, d_pad), jnp.float32)
    bias_row = bias_row.at[0, :D].set(bias.astype(jnp.float32))
    b_enc_row = jnp.zeros((1, s_pad), jnp.float32)
    b_enc_row = b_enc_row.at[0, :S].set(b_enc.astype(jnp.float32))

    return dict(bias_row=bias_row, w_enc_t=w_enc_t, b_enc_row=b_enc_row,
                w_dec_t=w_dec_t, activation_dim=D, dict_size=S, tile_s=tile_s)


# ----------------------------------------------------------------------------
# Forward pass.
# ----------------------------------------------------------------------------
def autoencoder_forward(x, params, *, output_features=False, tile_b=None,
                        features_dtype=jnp.bfloat16, out_dtype=None):
    """x: (B, D) activations. Returns x_hat (and f if output_features)."""
    gen, cfg = _gen_config()

    D = params["activation_dim"]
    S = params["dict_size"]
    tile_s = params["tile_s"]
    bias_row = params["bias_row"]
    w_enc_t = params["w_enc_t"]
    b_enc_row = params["b_enc_row"]
    w_dec_t = params["w_dec_t"]
    d_pad = bias_row.shape[1]
    s_pad = b_enc_row.shape[1]

    B = x.shape[0]
    out_dtype = x.dtype if out_dtype is None else out_dtype

    if tile_b is None:
        target_tb = cfg["tile_b"]
        if B >= target_tb:
            tile_b = target_tb                 # roofline-sized batch tile
        elif B >= 128:
            tile_b = _round_up(B, 128)         # full-width MXU M tiles
        else:
            tile_b = _round_up(B, 8)           # tiny batch: sublane-aligned
    b_pad = _round_up(B, tile_b)

    # v7x megacore: the "parallel" batch axis only shards across the 2 TCs if
    # there are >= 2 batch tiles.
    if gen == "v7x" and (b_pad // tile_b) < 2:
        half = b_pad // 2
        if half >= 8 and half % 8 == 0 and 2 * half == b_pad:
            tile_b = half

    # Zero-pad batch rows and feature lanes (lane-dense stores, cdiv-free grid).
    x_p = jnp.zeros((b_pad, d_pad), x.dtype).at[:B, :D].set(x)

    grid = (b_pad // tile_b, s_pad // tile_s)

    in_specs = [
        pl.BlockSpec((tile_b, d_pad), lambda i, s: (i, 0)),   # x tile (s-invariant)
        pl.BlockSpec((1, d_pad), lambda i, s: (0, 0)),        # bias (s-invariant)
        pl.BlockSpec((d_pad, tile_s), lambda i, s: (0, s)),   # W_enc^T slab
        pl.BlockSpec((1, tile_s), lambda i, s: (0, s)),       # b_enc slab
        pl.BlockSpec((tile_s, d_pad), lambda i, s: (s, 0)),   # W_dec^T slab
    ]
    xhat_spec = pl.BlockSpec((tile_b, d_pad), lambda i, s: (i, 0))
    xhat_shape = jax.ShapeDtypeStruct((b_pad, d_pad), out_dtype)
    scratch = [
        pltpu.VMEM((tile_b, d_pad), jnp.float32),    # decode accumulator
        pltpu.VMEM((tile_b, d_pad), jnp.bfloat16),   # hoisted centered-x cache
    ]
    cp_kwargs = dict(dimension_semantics=("parallel", "arbitrary"))
    if cfg["vmem_bytes"] is not None:
        cp_kwargs["vmem_limit_bytes"] = cfg["vmem_bytes"]
    cparams = pltpu.CompilerParams(**cp_kwargs)

    if output_features:
        x_hat_p, f_p = pl.pallas_call(
            _ae_kernel_features,
            out_shape=(
                xhat_shape,
                jax.ShapeDtypeStruct((b_pad, s_pad), features_dtype),
            ),
            grid_spec=pltpu.PrefetchScalarGridSpec(
                num_scalar_prefetch=0,
                grid=grid,
                in_specs=in_specs,
                out_specs=[
                    xhat_spec,
                    pl.BlockSpec((tile_b, tile_s), lambda i, s: (i, s)),
                ],
                scratch_shapes=scratch),
            compiler_params=cparams,
        )(x_p, bias_row, w_enc_t, b_enc_row, w_dec_t)
        return x_hat_p[:B, :D], f_p[:B, :S]

    x_hat_p = pl.pallas_call(
        _ae_kernel_no_features,
        out_shape=xhat_shape,
        grid_spec=pltpu.PrefetchScalarGridSpec(
            num_scalar_prefetch=0,
            grid=grid,
            in_specs=in_specs,
            out_specs=xhat_spec,
            scratch_shapes=scratch),
        compiler_params=cparams,
    )(x_p, bias_row, w_enc_t, b_enc_row, w_dec_t)
    return x_hat_p[:B, :D]


def autoencoder_reference(x, bias, w_enc, b_enc, w_dec):
    """Pure-JAX f32 reference mirroring the PyTorch forward."""
    f = jax.nn.relu((x - bias) @ w_enc.T + b_enc)
    x_hat = f @ w_dec.T + bias
    return x_hat, f


if __name__ == "__main__":
    # Small shapes consistent with the module: activation_dim=64, dict_size=256.
    # B=10 deliberately not a multiple of the batch tile to exercise padding.
    B, D, S = 10, 64, 256
    key = jax.random.PRNGKey(0)
    kx, kwe, kbe, kwd = jax.random.split(key, 4)

    x = jax.random.normal(kx, (B, D), dtype=jnp.float32)

    # Parameters mirroring AutoEncoder.__init__:
    #   bias = zeros(D); encoder = Linear(D, S); decoder.weight normalized along dim=0.
    bias = jnp.zeros((D,), dtype=jnp.float32)
    w_enc = jax.random.normal(kwe, (S, D), dtype=jnp.float32) / jnp.sqrt(float(D))
    b_enc = jax.random.normal(kbe, (S,), dtype=jnp.float32) * 0.01
    w_dec = jax.random.normal(kwd, (D, S), dtype=jnp.float32)
    w_dec = w_dec / jnp.linalg.norm(w_dec, axis=0, keepdims=True)

    # One-time parameter prep (transpose / bf16 cast / padding) outside the call.
    params = prepare_autoencoder_params(bias, w_enc, b_enc, w_dec)

    x_hat, f = autoencoder_forward(x, params, output_features=True)
    x_hat_only = autoencoder_forward(x, params, output_features=False)
    jax.block_until_ready((x_hat, f, x_hat_only))

    # Correctness check against the pure-JAX f32 reference.
    # bf16 matmul operands (and bf16 f output) with f32 accumulation -> loose tol.
    x_hat_ref, f_ref = autoencoder_reference(x, bias, w_enc, b_enc, w_dec)
    assert x_hat.shape == (B, D) and f.shape == (B, S)
    assert jnp.allclose(x_hat, x_hat_ref, atol=5e-2, rtol=5e-2), "x_hat mismatch"
    assert jnp.allclose(f.astype(jnp.float32), f_ref, atol=5e-2, rtol=5e-2), \
        "features mismatch"
    assert jnp.allclose(x_hat_only, x_hat, atol=1e-6, rtol=1e-6), \
        "no-features variant mismatch"

    print("KERNEL_OK")
</pallas_src>

<mosaic_0001>
module attributes {stable_mosaic.version = 11 : i64} {
  func.func @_ae_kernel_features(%arg0: i32, %arg1: i32, %arg2: memref<16x128xf32, #tpu.memory_space<vmem>>, %arg3: memref<1x128xf32, #tpu.memory_space<vmem>>, %arg4: memref<128x256xbf16, #tpu.memory_space<vmem>>, %arg5: memref<1x256xf32, #tpu.memory_space<vmem>>, %arg6: memref<256x128xbf16, #tpu.memory_space<vmem>>, %arg7: memref<16x128xf32, #tpu.memory_space<vmem>>, %arg8: memref<16x256xbf16, #tpu.memory_space<vmem>>, %arg9: memref<16x128xf32, #tpu.memory_space<vmem>>, %arg10: memref<16x128xbf16, #tpu.memory_space<vmem>>) attributes {dimension_semantics = [#tpu.dimension_semantics<parallel>, #tpu.dimension_semantics<arbitrary>], iteration_bounds = array<i64: 1, 1>, scalar_prefetch = 0 : i64, scratch_operands = 2 : i64, tpu.core_type = #tpu.core_type<tc>, window_params = [{transform_indices = @transform_0, window_bounds = array<i64: 16, 128>}, {pipeline_mode = #tpu.pipeline_mode<synchronous>, transform_indices = @transform_1, window_bounds = array<i64: 1, 128>}, {transform_indices = @transform_2, window_bounds = array<i64: 128, 256>}, {transform_indices = @transform_3, window_bounds = array<i64: 1, 256>}, {transform_indices = @transform_4, window_bounds = array<i64: 256, 128>}, {transform_indices = @transform_5, window_bounds = array<i64: 16, 128>}, {transform_indices = @transform_6, window_bounds = array<i64: 16, 256>}]} {
    %c0_i32 = arith.constant 0 : i32
    %0 = arith.cmpi eq, %arg1, %c0_i32 : i32
    %1 = arith.extui %0 : i1 to i32
    %c0_i32_0 = arith.constant 0 : i32
    %2 = arith.cmpi ne, %1, %c0_i32_0 : i32
    scf.if %2 {
      %cst_18 = arith.constant 0.000000e+00 : f32
      %21 = vector.broadcast %cst_18 : f32 to vector<16x128xf32>
      %c0_19 = arith.constant 0 : index
      %c0_20 = arith.constant 0 : index
      %22 = vector.load %arg9[%c0_19, %c0_20] : memref<16x128xf32, #tpu.memory_space<vmem>>, vector<16x128xf32>
      tpu.vector_store %arg9[%c0_19, %c0_20], %21 {strides = array<i32>} : memref<16x128xf32, #tpu.memory_space<vmem>>, vector<16x128xf32>,
      %c0_21 = arith.constant 0 : index
      %c0_22 = arith.constant 0 : index
      %23 = vector.load %arg2[%c0_21, %c0_22] : memref<16x128xf32, #tpu.memory_space<vmem>>, vector<16x128xf32>
      %c0_23 = arith.constant 0 : index
      %c0_24 = arith.constant 0 : index
      %24 = vector.load %arg3[%c0_23, %c0_24] : memref<1x128xf32, #tpu.memory_space<vmem>>, vector<1x128xf32>
      %25 = vector.broadcast %24 : vector<1x128xf32> to vector<16x128xf32>
      %26 = arith.subf %23, %25 : vector<16x128xf32>
      %27 = arith.truncf %26 : vector<16x128xf32> to vector<16x128xbf16>
      %c0_25 = arith.constant 0 : index
      %c0_26 = arith.constant 0 : index
      %28 = vector.load %arg10[%c0_25, %c0_26] : memref<16x128xbf16, #tpu.memory_space<vmem>>, vector<16x128xbf16>
      tpu.vector_store %arg10[%c0_25, %c0_26], %27 {strides = array<i32>} : memref<16x128xbf16, #tpu.memory_space<vmem>>, vector<16x128xbf16>,
    } else {
    }
    %c0 = arith.constant 0 : index
    %c0_1 = arith.constant 0 : index
    %3 = vector.load %arg10[%c0, %c0_1] : memref<16x128xbf16, #tpu.memory_space<vmem>>, vector<16x128xbf16>
    %c0_2 = arith.constant 0 : index
    %c0_3 = arith.constant 0 : index
    %4 = vector.load %arg4[%c0_2, %c0_3] : memref<128x256xbf16, #tpu.memory_space<vmem>>, vector<128x256xbf16>
    %cst = arith.constant dense<0.000000e+00> : vector<16x256xf32>
    %5 = tpu.matmul %3, %4, %cst {dimension_numbers = #tpu.dot_dimension_numbers<[1], [0], [0], [1], [0, 0, 1, 1], [], []>} : vector<16x128xbf16>, vector<128x256xbf16>, vector<16x256xf32> -> vector<16x256xf32>
    %c0_4 = arith.constant 0 : index
    %c0_5 = arith.constant 0 : index
    %6 = vector.load %arg5[%c0_4, %c0_5] : memref<1x256xf32, #tpu.memory_space<vmem>>, vector<1x256xf32>
    %7 = vector.broadcast %6 : vector<1x256xf32> to vector<16x256xf32>
    %8 = arith.addf %5, %7 : vector<16x256xf32>
    %cst_6 = arith.constant 0.000000e+00 : f32
    %9 = vector.broadcast %cst_6 : f32 to vector<16x256xf32>
    %10 = arith.maximumf %8, %9 : vector<16x256xf32>
    %11 = arith.truncf %10 : vector<16x256xf32> to vector<16x256xbf16>
    %c0_7 = arith.constant 0 : index
    %c0_8 = arith.constant 0 : index
    %12 = vector.load %arg8[%c0_7, %c0_8] : memref<16x256xbf16, #tpu.memory_space<vmem>>, vector<16x256xbf16>
    tpu.vector_store %arg8[%c0_7, %c0_8], %11 {strides = array<i32>} : memref<16x256xbf16, #tpu.memory_space<vmem>>, vector<16x256xbf16>,
    %c0_9 = arith.constant 0 : index
    %c0_10 = arith.constant 0 : index
    %13 = vector.load %arg9[%c0_9, %c0_10] : memref<16x128xf32, #tpu.memory_space<vmem>>, vector<16x128xf32>
    %c0_11 = arith.constant 0 : index
    %c0_12 = arith.constant 0 : index
    %14 = vector.load %arg6[%c0_11, %c0_12] : memref<256x128xbf16, #tpu.memory_space<vmem>>, vector<256x128xbf16>
    %cst_13 = arith.constant dense<0.000000e+00> : vector<16x128xf32>
    %15 = tpu.matmul %11, %14, %cst_13 {dimension_numbers = #tpu.dot_dimension_numbers<[1], [0], [0], [1], [0, 0, 1, 1], [], []>} : vector<16x256xbf16>, vector<256x128xbf16>, vector<16x128xf32> -> vector<16x128xf32>
    %16 = arith.addf %13, %15 : vector<16x128xf32>
    %c0_14 = arith.constant 0 : index
    %c0_15 = arith.constant 0 : index
    %17 = vector.load %arg9[%c0_14, %c0_15] : memref<16x128xf32, #tpu.memory_space<vmem>>, vector<16x128xf32>
    tpu.vector_store %arg9[%c0_14, %c0_15], %16 {strides = array<i32>} : memref<16x128xf32, #tpu.memory_space<vmem>>, vector<16x128xf32>,
    %c0_i32_16 = arith.constant 0 : i32
    %18 = arith.cmpi eq, %arg1, %c0_i32_16 : i32
    %19 = arith.extui %18 : i1 to i32
    %c0_i32_17 = arith.constant 0 : i32
    %20 = arith.cmpi ne, %19, %c0_i32_17 : i32
    scf.if %20 {
      %c0_18 = arith.constant 0 : index
      %c0_19 = arith.constant 0 : index
      %21 = vector.load %arg9[%c0_18, %c0_19] : memref<16x128xf32, #tpu.memory_space<vmem>>, vector<16x128xf32>
      %c0_20 = arith.constant 0 : index
      %c0_21 = arith.constant 0 : index
      %22 = vector.load %arg3[%c0_20, %c0_21] : memref<1x128xf32, #tpu.memory_space<vmem>>, vector<1x128xf32>
      %23 = vector.broadcast %22 : vector<1x128xf32> to vector<16x128xf32>
      %24 = arith.addf %21, %23 : vector<16x128xf32>
      %c0_22 = arith.constant 0 : index
      %c0_23 = arith.constant 0 : index
      %25 = vector.load %arg7[%c0_22, %c0_23] : memref<16x128xf32, #tpu.memory_space<vmem>>, vector<16x128xf32>
      tpu.vector_store %arg7[%c0_22, %c0_23], %24 {strides = array<i32>} : memref<16x128xf32, #tpu.memory_space<vmem>>, vector<16x128xf32>,
    } else {
    }
    return
  }
  func.func @transform_0(%arg0: i32, %arg1: i32) -> (i32, i32) {
    %c0_i32 = arith.constant 0 : i32
    %c0_i32_0 = arith.constant 0 : i32
    return %arg0, %c0_i32 : i32, i32
  }
  func.func @transform_1(%arg0: i32, %arg1: i32) -> (i32, i32) {
    %c0_i32 = arith.constant 0 : i32
    %c0_i32_0 = arith.constant 0 : i32
    %c0_i32_1 = arith.constant 0 : i32
    return %c0_i32, %c0_i32_0 : i32, i32
  }
  func.func @transform_2(%arg0: i32, %arg1: i32) -> (i32, i32) {
    %c0_i32 = arith.constant 0 : i32
    %c0_i32_0 = arith.constant 0 : i32
    return %c0_i32, %arg1 : i32, i32
  }
  func.func @transform_3(%arg0: i32, %arg1: i32) -> (i32, i32) {
    %c0_i32 = arith.constant 0 : i32
    %c0_i32_0 = arith.constant 0 : i32
    return %c0_i32, %arg1 : i32, i32
  }
  func.func @transform_4(%arg0: i32, %arg1: i32) -> (i32, i32) {
    %c0_i32 = arith.constant 0 : i32
    %c0_i32_0 = arith.constant 0 : i32
    return %arg1, %c0_i32 : i32, i32
  }
  func.func @transform_5(%arg0: i32, %arg1: i32) -> (i32, i32) {
    %c0_i32 = arith.constant 0 : i32
    %c0_i32_0 = arith.constant 0 : i32
    return %arg0, %c0_i32 : i32, i32
  }
  func.func @transform_6(%arg0: i32, %arg1: i32) -> (i32, i32) {
    %c0_i32 = arith.constant 0 : i32
    return %arg0, %arg1 : i32, i32
  }
}

</mosaic_0001>

<llo_original>
// kernel: tpu_custom_call.1
$region0: #{tpu_custom_call.1}
  #allocation0 [shape = 'u32[]', space=smem, size = 0x4, offset = 0x4, fixed_abs, tag = 'smem constant byte address 0x4 - core index']
  #allocation1 [shape = 'u32[144,128]{1,0:T(1,128)}', space=vmem, size = 0x12000, scoped, tag = 'internal scratch']
  #allocation2 [shape = 'f32[16,128]{1,0:T(8,128)}', space=vmem, size = 0x2000, scoped, tag = 'scratch operand']
  #allocation3 [shape = 'bf16[16,128]{1,0:T(8,128)(2,1)}', space=vmem, size = 0x1000, scoped, tag = 'scratch operand']
  %s0 = inlined_call_operand.hbm [shape: f32[16,128], index: 0, kind: input, shape index: {}]
  %s1 = inlined_call_operand.vmem [shape: f32[1,128], index: 1, kind: input, shape index: {}]
  %s2 = inlined_call_operand.hbm [shape: bf16[128,256], index: 2, kind: input, shape index: {}]
  %s3 = inlined_call_operand.vmem [shape: f32[1,256], index: 3, kind: input, shape index: {}]
  %s4 = inlined_call_operand.hbm [shape: bf16[256,128], index: 4, kind: input, shape index: {}]
  %s5 = inlined_call_operand.hbm [shape: f32[16,128], index: 5, kind: output, shape index: {0}]
  %s6 = inlined_call_operand.hbm [shape: bf16[16,256], index: 6, kind: output, shape index: {1}]
  %7 = xla_tuple %s5, %s6
  %s8 = sld [smem:[#allocation0]]
  $region58: #{tpu_custom_call.1} parent=0
    _
  %s10 = ssub.s32 1, %s8
  %s11 = scalar_select 0, %s10, %s8
  $region1: #{tpu_custom_call.1} parent=0
    #allocation4 [shape = 'u8[8192]{0}', space=vmem, size = 0x2000, scoped, tag = 'input window, operand 0, single buffered']
    #allocation5 [shape = 's32[1]{0}', space=sflag, size = 0x4, scoped, tag = 'scoped memory for tpu_custom_call.1']
    #allocation6 [shape = 's32[1]{0}', space=sflag, size = 0x4, scoped, tag = 'scoped memory for tpu_custom_call.1']
    #allocation7 [shape = 'u8[65536]{0}', space=vmem, size = 0x10000, scoped, tag = 'input window, operand 2, single buffered']
    #allocation8 [shape = 's32[1]{0}', space=sflag, size = 0x4, scoped, tag = 'scoped memory for tpu_custom_call.1']
    #allocation9 [shape = 'u8[65536]{0}', space=vmem, size = 0x10000, scoped, tag = 'input window, operand 4, single buffered']
    #allocation10 [shape = 'u8[8192]{0}', space=vmem, size = 0x2000, scoped, tag = 'output window, operand 0, single buffered']
    #allocation11 [shape = 'u8[8192]{0}', space=vmem, size = 0x2000, scoped, tag = 'output window, operand 1, single buffered']
    #allocation12 [shape = 's32[1]{0}', space=sflag, size = 0x4, scoped, tag = 'scoped memory for tpu_custom_call.1']
    %12 = vsyncpa [#allocation5], 0
    %13 = vsyncpa [#allocation8], 0
    %14 = vsyncpa [#allocation6], 0
    %15 = vsyncpa [#allocation12], 0
    // Predicated region
    $region2: #{tpu_custom_call.1} parent=1 // pred_check
      _
    $region3: #{tpu_custom_call.1} parent=1 // pred_check_branch
      %17 = sbr.rel (0) target = $region5
    $region4: #{tpu_custom_call.1} parent=1 // pred_region
      %s19 = ssub.s32 256, 256
      %20 = vsyncadd [#allocation5], %s19
      %s21 = sshll.u32 [#allocation4], 4
      %s22 = int_to_ptr.vmem [resolvable:$true] %s21
      %27 = dma.hbm_to_vmem [thread:$0]  %s0, 256, %s22, [#allocation5], 128, 128, 8
    $region5: #{tpu_custom_call.1} parent=1 // pred_fallthru
      _
    // Predicated region
    $region6: #{tpu_custom_call.1} parent=1 // pred_check
      _
    $region7: #{tpu_custom_call.1} parent=1 // pred_check_branch
      %29 = sbr.rel (0) target = $region9
    $region8: #{tpu_custom_call.1} parent=1 // pred_region
      _
    $region9: #{tpu_custom_call.1} parent=1 // pred_fallthru
      _
    // Predicated region
    $region10: #{tpu_custom_call.1} parent=1 // pred_check
      _
    $region11: #{tpu_custom_call.1} parent=1 // pred_check_branch
      %31 = sbr.rel (0) target = $region13
    $region12: #{tpu_custom_call.1} parent=1 // pred_region
      %s33 = ssub.s32 2048, 2048
      %34 = vsyncadd [#allocation8], %s33
      %s35 = sshll.u32 [#allocation7], 4
      %s36 = int_to_ptr.vmem [resolvable:$true] %s35
      %41 = dma.hbm_to_vmem [thread:$0]  %s2, 2048, %s36, [#allocation8], 128, 128, 8
    $region13: #{tpu_custom_call.1} parent=1 // pred_fallthru
      _
    // Predicated region
    $region14: #{tpu_custom_call.1} parent=1 // pred_check
      _
    $region15: #{tpu_custom_call.1} parent=1 // pred_check_branch
      %43 = sbr.rel (0) target = $region17
    $region16: #{tpu_custom_call.1} parent=1 // pred_region
      _
    $region17: #{tpu_custom_call.1} parent=1 // pred_fallthru
      _
    // Predicated region
    $region18: #{tpu_custom_call.1} parent=1 // pred_check
      _
    $region19: #{tpu_custom_call.1} parent=1 // pred_check_branch
      %45 = sbr.rel (0) target = $region21
    $region20: #{tpu_custom_call.1} parent=1 // pred_region
      %s47 = ssub.s32 2048, 2048
      %48 = vsyncadd [#allocation8], %s47
      %s49 = sshll.u32 [#allocation9], 4
      %s50 = int_to_ptr.vmem [resolvable:$true] %s49
      %55 = dma.hbm_to_vmem [thread:$0]  %s4, 2048, %s50, [#allocation8], 64, 64, 4
    $region21: #{tpu_custom_call.1} parent=1 // pred_fallthru
      _
    // Predicated region
    $region22: #{tpu_custom_call.1} parent=1 // pred_check
      _
    $region23: #{tpu_custom_call.1} parent=1 // pred_check_branch
      %57 = sbr.rel (0) target = $region25
    $region24: #{tpu_custom_call.1} parent=1 // pred_region
      %58 = dma.done [#allocation5], 256
    $region25: #{tpu_custom_call.1} parent=1 // pred_fallthru
      _
    // Predicated region
    $region26: #{tpu_custom_call.1} parent=1 // pred_check
      _
    $region27: #{tpu_custom_call.1} parent=1 // pred_check_branch
      %60 = sbr.rel (0) target = $region29
    $region28: #{tpu_custom_call.1} parent=1 // pred_region
      %61 = dma.done [#allocation8], 2048
    $region29: #{tpu_custom_call.1} parent=1 // pred_fallthru
      _
    // Predicated region
    $region30: #{tpu_custom_call.1} parent=1 // pred_check
      _
    $region31: #{tpu_custom_call.1} parent=1 // pred_check_branch
      %63 = sbr.rel (0) target = $region33
    $region32: #{tpu_custom_call.1} parent=1 // pred_region
      %64 = dma.done [#allocation8], 2048
    $region33: #{tpu_custom_call.1} parent=1 // pred_fallthru
      _
    %p66 = scmp.eq.s32.totalorder 0, 0
    // Predicated region
    $region34: #{tpu_custom_call.1} parent=1 // pred_check
      %p67 = pneg %p66
    $region35: #{tpu_custom_call.1} parent=1 // pred_check_branch
      %69 = sbr.rel (%p67) target = $region37
    $region36: #{tpu_custom_call.1} parent=1 // pred_region
      %70 = vst [vmem:[#allocation2] sm:$0xff] 0.0
      %71 = vst [vmem:[#allocation2 + $0x8] sm:$0xff] 0.0
      %v72 = vld [vmem:[#allocation4] sm:$0xff]
      %v73 = vld [vmem:[#allocation4 + $0x8] sm:$0xff]
      %v74 = vld [vmem:[%s1] sm:$0x1]
      %v76 = vlaneseq
      %v77 = vshrl.u32 %v76, 7
      %v78 = vsub.s32 0, %v77
      %v79 = vrot.slane %v74, %v78
      %v81 = vsub.f32 %v72, %v79
      %v82 = vsub.f32 %v73, %v79
      %v83 = vpack.c.bf16 %v82, %v81
      %v85 = vunpack.c.l.b16 %v83
      %v86 = vunpack.c.h.b16 %v83
      %v87 = vpack.c.b16 %v85, %v85
      %v88 = vpack.c.b16 %v86, %v86
      %91 = vst [vmem:[#allocation3] sm:$0xf] %v87
      %92 = vst [vmem:[#allocation3 + $0x4] sm:$0xf] %v88
    $region37: #{tpu_custom_call.1} parent=1 // pred_fallthru
      _
    %v93 = vld [vmem:[#allocation3] sm:$0xf]
    %v94 = vld [vmem:[#allocation3 + $0x4] sm:$0xf]
    %v95 = vld [vmem:[#allocation7] sm:$0xff]
    %v96 = vld [vmem:[#allocation7 + $0x8] sm:$0xff]
    %v97 = vld [vmem:[#allocation7 + $0x10] sm:$0xff]
    %v98 = vld [vmem:[#allocation7 + $0x18] sm:$0xff]
    %v99 = vld [vmem:[#allocation7 + $0x20] sm:$0xff]
    %v100 = vld [vmem:[#allocation7 + $0x28] sm:$0xff]
    %v101 = vld [vmem:[#allocation7 + $0x30] sm:$0xff]
    %v102 = vld [vmem:[#allocation7 + $0x38] sm:$0xff]
    %v103 = vld [vmem:[#allocation7 + $0x40] sm:$0xff]
    %v104 = vld [vmem:[#allocation7 + $0x48] sm:$0xff]
    %v105 = vld [vmem:[#allocation7 + $0x50] sm:$0xff]
    %v106 = vld [vmem:[#allocation7 + $0x58] sm:$0xff]
    %v107 = vld [vmem:[#allocation7 + $0x60] sm:$0xff]
    %v108 = vld [vmem:[#allocation7 + $0x68] sm:$0xff]
    %v109 = vld [vmem:[#allocation7 + $0x70] sm:$0xff]
    %v110 = vld [vmem:[#allocation7 + $0x78] sm:$0xff]
    %v111 = vld [vmem:[%s3] sm:$0x3]
    %v113 = vlaneseq
    %v114 = vshrl.u32 %v113, 7
    %v115 = vsub.s32 0, %v114
    %v116 = vrot.slane %v111, %v115
    %v117 = vlaneseq
    %v118 = vshrl.u32 %v117, 7
    %v119 = vsub.s32 1, %v118
    %v120 = vrot.slane %v111, %v119
    %v125 = vunpack.c.l.b16 %v93
    %v126 = vunpack.c.l.b16 %v94
    %v127 = vpack.c.b16 %v126, %v125
    %v145 = vunpack.c.l.b16 %v95
    %v146 = vunpack.c.h.b16 %v95
    %v147 = vunpack.c.l.b16 %v96
    %v148 = vunpack.c.h.b16 %v96
    %v149 = vunpack.c.l.b16 %v97
    %v150 = vunpack.c.h.b16 %v97
    %v151 = vunpack.c.l.b16 %v98
    %v152 = vunpack.c.h.b16 %v98
    %v153 = vunpack.c.l.b16 %v99
    %v154 = vunpack.c.h.b16 %v99
    %v155 = vunpack.c.l.b16 %v100
    %v156 = vunpack.c.h.b16 %v100
    %v157 = vunpack.c.l.b16 %v101
    %v158 = vunpack.c.h.b16 %v101
    %v159 = vunpack.c.l.b16 %v102
    %v160 = vunpack.c.h.b16 %v102
    %v161 = vunpack.c.l.b16 %v103
    %v162 = vunpack.c.h.b16 %v103
    %v163 = vunpack.c.l.b16 %v104
    %v164 = vunpack.c.h.b16 %v104
    %v165 = vunpack.c.l.b16 %v105
    %v166 = vunpack.c.h.b16 %v105
    %v167 = vunpack.c.l.b16 %v106
    %v168 = vunpack.c.h.b16 %v106
    %v169 = vunpack.c.l.b16 %v107
    %v170 = vunpack.c.h.b16 %v107
    %v171 = vunpack.c.l.b16 %v108
    %v172 = vunpack.c.h.b16 %v108
    %v173 = vunpack.c.l.b16 %v109
    %v174 = vunpack.c.h.b16 %v109
    %v175 = vunpack.c.l.b16 %v110
    %v176 = vunpack.c.h.b16 %v110
    %v177 = vpack.c.b16 %v147, %v145
    %v178 = vpack.c.b16 %v148, %v146
    %v179 = vpack.c.b16 %v151, %v149
    %v180 = vpack.c.b16 %v152, %v150
    %v181 = vpack.c.b16 %v155, %v153
    %v182 = vpack.c.b16 %v156, %v154
    %v183 = vpack.c.b16 %v159, %v157
    %v184 = vpack.c.b16 %v160, %v158
    %v185 = vpack.c.b16 %v163, %v161
    %v186 = vpack.c.b16 %v164, %v162
    %v187 = vpack.c.b16 %v167, %v165
    %v188 = vpack.c.b16 %v168, %v166
    %v189 = vpack.c.b16 %v171, %v169
    %v190 = vpack.c.b16 %v172, %v170
    %v191 = vpack.c.b16 %v175, %v173
    %v192 = vpack.c.b16 %v176, %v174
    %209 = vmatprep.subr.bf16.mxu0 %v192
    %210 = vmatpush1.bf16.msra.mxu0 %v191
    %211 = vmatprep.subr.bf16.mxu0 %v190
    %212 = vmatpush1.bf16.msra.mxu0 %v189
    %213 = vmatprep.subr.bf16.mxu0 %v188
    %214 = vmatpush1.bf16.msra.mxu0 %v187
    %215 = vmatprep.subr.bf16.mxu0 %v186
    %216 = vmatpush1.bf16.msra.mxu0 %v185
    %217 = vmatprep.subr.bf16.mxu0 %v184
    %218 = vmatpush1.bf16.msra.mxu0 %v183
    %219 = vmatprep.subr.bf16.mxu0 %v182
    %220 = vmatpush1.bf16.msra.mxu0 %v181
    %221 = vmatprep.subr.bf16.mxu0 %v180
    %222 = vmatpush1.bf16.msra.mxu0 %v179
    %223 = vmatprep.subr.bf16.mxu0 %v178
    %224 = vmatpush1.bf16.msra.mxu0 %v177
    %225 = vmatprep.subr.bf16.mxu0 0
    %226 = vmatpush2.bf16.msra.mxu0 0
    %227 = vmatprep.subr.bf16.mxu0 0
    %228 = vmatpush2.bf16.msra.mxu0 0
    %229 = vmatprep.subr.bf16.mxu0 0
    %230 = vmatpush2.bf16.msra.mxu0 0
    %231 = vmatprep.subr.bf16.mxu0 0
    %232 = vmatpush2.bf16.msra.mxu0 0
    %233 = vmatprep.subr.bf16.mxu0 0
    %234 = vmatpush2.bf16.msra.mxu0 0
    %235 = vmatprep.subr.bf16.mxu0 0
    %236 = vmatpush2.bf16.msra.mxu0 0
    %237 = vmatprep.subr.bf16.mxu0 0
    %238 = vmatpush2.bf16.msra.mxu0 0
    %239 = vmatprep.subr.bf16.mxu0 0
    %240 = vmatpush2.bf16.msra.mxu0 0
    %241 = vmatprep.mubr.bf16.mxu0 0
    %242 = vmatmul.mubr.bf16.gmra.mxu0 %v127
    %v243 = vpop.f32.mrf.mxu0
    %v244 = vadd.f32 %v116, %v243
    %v245 = vpop.f32.mrf.mxu0
    %v246 = vadd.f32 %v120, %v245
    %v247 = vpop.f32.mrf.mxu0
    %v248 = vadd.f32 %v116, %v247
    %v249 = vpop.f32.mrf.mxu0
    %v250 = vadd.f32 %v120, %v249
    %251 = vdwg.mxu0
    %v252 = vmax.f32 %v244, 0.0
    %v253 = vmax.f32 %v246, 0.0
    %v254 = vmax.f32 %v248, 0.0
    %v255 = vmax.f32 %v250, 0.0
    %v256 = vpack.c.bf16 %v254, %v252
    %v257 = vpack.c.bf16 %v255, %v253
    %v260 = vunpack.c.l.b16 %v256
    %v261 = vunpack.c.l.b16 %v257
    %v262 = vunpack.c.h.b16 %v256
    %v263 = vunpack.c.h.b16 %v257
    %v264 = vpack.c.b16 %v261, %v260
    %v265 = vpack.c.b16 %v263, %v262
    %268 = vst [vmem:[#allocation11] sm:$0xff] %v264
    %269 = vst [vmem:[#allocation11 + $0x8] sm:$0xff] %v265
    %v270 = vld [vmem:[#allocation2] sm:$0xff]
    %v271 = vld [vmem:[#allocation2 + $0x8] sm:$0xff]
    %v272 = vld [vmem:[#allocation9] sm:$0xf]
    %v273 = vld [vmem:[#allocation9 + $0x4] sm:$0xf]
    %v274 = vld [vmem:[#allocation9 + $0x8] sm:$0xf]
    %v275 = vld [vmem:[#allocation9 + $0xc] sm:$0xf]
    %v276 = vld [vmem:[#allocation9 + $0x10] sm:$0xf]
    %v277 = vld [vmem:[#allocation9 + $0x14] sm:$0xf]
    %v278 = vld [vmem:[#allocation9 + $0x18] sm:$0xf]
    %v279 = vld [vmem:[#allocation9 + $0x1c] sm:$0xf]
    %v280 = vld [vmem:[#allocation9 + $0x20] sm:$0xf]
    %v281 = vld [vmem:[#allocation9 + $0x24] sm:$0xf]
    %v282 = vld [vmem:[#allocation9 + $0x28] sm:$0xf]
    %v283 = vld [vmem:[#allocation9 + $0x2c] sm:$0xf]
    %v284 = vld [vmem:[#allocation9 + $0x30] sm:$0xf]
    %v285 = vld [vmem:[#allocation9 + $0x34] sm:$0xf]
    %v286 = vld [vmem:[#allocation9 + $0x38] sm:$0xf]
    %v287 = vld [vmem:[#allocation9 + $0x3c] sm:$0xf]
    %v288 = vld [vmem:[#allocation9 + $0x40] sm:$0xf]
    %v289 = vld [vmem:[#allocation9 + $0x44] sm:$0xf]
    %v290 = vld [vmem:[#allocation9 + $0x48] sm:$0xf]
    %v291 = vld [vmem:[#allocation9 + $0x4c] sm:$0xf]
    %v292 = vld [vmem:[#allocation9 + $0x50] sm:$0xf]
    %v293 = vld [vmem:[#allocation9 + $0x54] sm:$0xf]
    %v294 = vld [vmem:[#allocation9 + $0x58] sm:$0xf]
    %v295 = vld [vmem:[#allocation9 + $0x5c] sm:$0xf]
    %v296 = vld [vmem:[#allocation9 + $0x60] sm:$0xf]
    %v297 = vld [vmem:[#allocation9 + $0x64] sm:$0xf]
    %v298 = vld [vmem:[#allocation9 + $0x68] sm:$0xf]
    %v299 = vld [vmem:[#allocation9 + $0x6c] sm:$0xf]
    %v300 = vld [vmem:[#allocation9 + $0x70] sm:$0xf]
    %v301 = vld [vmem:[#allocation9 + $0x74] sm:$0xf]
    %v302 = vld [vmem:[#allocation9 + $0x78] sm:$0xf]
    %v303 = vld [vmem:[#allocation9 + $0x7c] sm:$0xf]
    %v336 = vunpack.c.l.b16 %v272
    %v337 = vunpack.c.l.b16 %v273
    %v338 = vunpack.c.l.b16 %v274
    %v339 = vunpack.c.l.b16 %v275
    %v340 = vunpack.c.l.b16 %v276
    %v341 = vunpack.c.l.b16 %v277
    %v342 = vunpack.c.l.b16 %v278
    %v343 = vunpack.c.l.b16 %v279
    %v344 = vunpack.c.l.b16 %v280
    %v345 = vunpack.c.l.b16 %v281
    %v346 = vunpack.c.l.b16 %v282
    %v347 = vunpack.c.l.b16 %v283
    %v348 = vunpack.c.l.b16 %v284
    %v349 = vunpack.c.l.b16 %v285
    %v350 = vunpack.c.l.b16 %v286
    %v351 = vunpack.c.l.b16 %v287
    %v352 = vunpack.c.l.b16 %v288
    %v353 = vunpack.c.l.b16 %v289
    %v354 = vunpack.c.l.b16 %v290
    %v355 = vunpack.c.l.b16 %v291
    %v356 = vunpack.c.l.b16 %v292
    %v357 = vunpack.c.l.b16 %v293
    %v358 = vunpack.c.l.b16 %v294
    %v359 = vunpack.c.l.b16 %v295
    %v360 = vunpack.c.l.b16 %v296
    %v361 = vunpack.c.l.b16 %v297
    %v362 = vunpack.c.l.b16 %v298
    %v363 = vunpack.c.l.b16 %v299
    %v364 = vunpack.c.l.b16 %v300
    %v365 = vunpack.c.l.b16 %v301
    %v366 = vunpack.c.l.b16 %v302
    %v367 = vunpack.c.l.b16 %v303
    %v368 = vpack.c.b16 %v337, %v336
    %v369 = vpack.c.b16 %v339, %v338
    %v370 = vpack.c.b16 %v341, %v340
    %v371 = vpack.c.b16 %v343, %v342
    %v372 = vpack.c.b16 %v345, %v344
    %v373 = vpack.c.b16 %v347, %v346
    %v374 = vpack.c.b16 %v349, %v348
    %v375 = vpack.c.b16 %v351, %v350
    %v376 = vpack.c.b16 %v353, %v352
    %v377 = vpack.c.b16 %v355, %v354
    %v378 = vpack.c.b16 %v357, %v356
    %v379 = vpack.c.b16 %v359, %v358
    %v380 = vpack.c.b16 %v361, %v360
    %v381 = vpack.c.b16 %v363, %v362
    %v382 = vpack.c.b16 %v365, %v364
    %v383 = vpack.c.b16 %v367, %v366
    %400 = vmatprep.subr.bf16.mxu0 0
    %401 = vmatpush1.bf16.msra.mxu0 %v375
    %402 = vmatprep.subr.bf16.mxu0 0
    %403 = vmatpush1.bf16.msra.mxu0 %v374
    %404 = vmatprep.subr.bf16.mxu0 0
    %405 = vmatpush1.bf16.msra.mxu0 %v373
    %406 = vmatprep.subr.bf16.mxu0 0
    %407 = vmatpush1.bf16.msra.mxu0 %v372
    %408 = vmatprep.subr.bf16.mxu0 0
    %409 = vmatpush1.bf16.msra.mxu0 %v371
    %410 = vmatprep.subr.bf16.mxu0 0
    %411 = vmatpush1.bf16.msra.mxu0 %v370
    %412 = vmatprep.subr.bf16.mxu0 0
    %413 = vmatpush1.bf16.msra.mxu0 %v369
    %414 = vmatprep.subr.bf16.mxu0 0
    %415 = vmatpush1.bf16.msra.mxu0 %v368
    %416 = vmatprep.subr.bf16.mxu0 0
    %417 = vmatpush2.bf16.msra.mxu0 %v383
    %418 = vmatprep.subr.bf16.mxu0 0
    %419 = vmatpush2.bf16.msra.mxu0 %v382
    %420 = vmatprep.subr.bf16.mxu0 0
    %421 = vmatpush2.bf16.msra.mxu0 %v381
    %422 = vmatprep.subr.bf16.mxu0 0
    %423 = vmatpush2.bf16.msra.mxu0 %v380
    %424 = vmatprep.subr.bf16.mxu0 0
    %425 = vmatpush2.bf16.msra.mxu0 %v379
    %426 = vmatprep.subr.bf16.mxu0 0
    %427 = vmatpush2.bf16.msra.mxu0 %v378
    %428 = vmatprep.subr.bf16.mxu0 0
    %429 = vmatpush2.bf16.msra.mxu0 %v377
    %430 = vmatprep.subr.bf16.mxu0 0
    %431 = vmatpush2.bf16.msra.mxu0 %v376
    %432 = vmatprep.mubr.bf16.mxu0 %v257
    %433 = vmatmul.mubr.bf16.gmra.mxu0 %v256
    %v434 = vpop.f32.mrf.mxu0
    %v435 = vadd.f32 0.0, %v434
    %v436 = vpop.f32.mrf.mxu0
    %v437 = vpop.f32.mrf.mxu0
    %v438 = vadd.f32 0.0, %v437
    %v439 = vpop.f32.mrf.mxu0
    %440 = vdwg.mxu0
    %v441 = vadd.f32 %v270, %v435
    %v442 = vadd.f32 %v271, %v438
    %443 = vst [vmem:[#allocation2] sm:$0xff] %v441
    %444 = vst [vmem:[#allocation2 + $0x8] sm:$0xff] %v442
    // Predicated region
    $region38: #{tpu_custom_call.1} parent=1 // pred_check
      %p445 = pneg %p66
    $region39: #{tpu_custom_call.1} parent=1 // pred_check_branch
      %447 = sbr.rel (%p445) target = $region41
    $region40: #{tpu_custom_call.1} parent=1 // pred_region
      %v448 = vld [vmem:[#allocation2] sm:$0xff]
      %v449 = vld [vmem:[#allocation2 + $0x8] sm:$0xff]
      %v450 = vld [vmem:[%s1] sm:$0x1]
      %v452 = vlaneseq
      %v453 = vshrl.u32 %v452, 7
      %v454 = vsub.s32 0, %v453
      %v455 = vrot.slane %v450, %v454
      %v457 = vadd.f32 %v448, %v455
      %v458 = vadd.f32 %v449, %v455
      %459 = vst [vmem:[#allocation10] sm:$0xff] %v457
      %460 = vst [vmem:[#allocation10 + $0x8] sm:$0xff] %v458
    $region41: #{tpu_custom_call.1} parent=1 // pred_fallthru
      _
    // Predicated region
    $region42: #{tpu_custom_call.1} parent=1 // pred_check
      _
    $region43: #{tpu_custom_call.1} parent=1 // pred_check_branch
      %462 = sbr.rel (0) target = $region45
    $region44: #{tpu_custom_call.1} parent=1 // pred_region
      %s464 = ssub.s32 256, 256
      %465 = vsyncadd [#allocation6], %s464
      %s466 = sshll.u32 [#allocation10], 4
      %s467 = int_to_ptr.vmem [resolvable:$true] %s466
      %472 = dma.vmem_to_hbm [thread:$0]  %s467, 256, %s5, [#allocation6], 128, 128, 8
    $region45: #{tpu_custom_call.1} parent=1 // pred_fallthru
      _
    // Predicated region
    $region46: #{tpu_custom_call.1} parent=1 // pred_check
      _
    $region47: #{tpu_custom_call.1} parent=1 // pred_check_branch
      %474 = sbr.rel (0) target = $region49
    $region48: #{tpu_custom_call.1} parent=1 // pred_region
      %s476 = ssub.s32 256, 256
      %477 = vsyncadd [#allocation12], %s476
      %s478 = sshll.u32 [#allocation11], 4
      %s479 = int_to_ptr.vmem [resolvable:$true] %s478
      %484 = dma.vmem_to_hbm [thread:$0]  %s479, 256, %s6, [#allocation12], 128, 128, 8
    $region49: #{tpu_custom_call.1} parent=1 // pred_fallthru
      _
    // Predicated region
    $region50: #{tpu_custom_call.1} parent=1 // pred_check
      _
    $region51: #{tpu_custom_call.1} parent=1 // pred_check_branch
      %486 = sbr.rel (0) target = $region53
    $region52: #{tpu_custom_call.1} parent=1 // pred_region
      %487 = dma.done [#allocation6], 256
    $region53: #{tpu_custom_call.1} parent=1 // pred_fallthru
      _
    // Predicated region
    $region54: #{tpu_custom_call.1} parent=1 // pred_check
      _
    $region55: #{tpu_custom_call.1} parent=1 // pred_check_branch
      %489 = sbr.rel (0) target = $region57
    $region56: #{tpu_custom_call.1} parent=1 // pred_region
      %490 = dma.done [#allocation12], 256
    $region57: #{tpu_custom_call.1} parent=1 // pred_fallthru
      _
    %491 = vsyncpa [#allocation5], 1
    %492 = vsyncpa [#allocation8], 1
    %493 = vsyncpa [#allocation6], 1
    %494 = vsyncpa [#allocation12], 1

</llo_original>
